<compile_context>
chip_gen: v7x
topology: tpu7x:2x2x1
jax: 0.10.0
libtpu: 0.0.40
codegen_flags: <defaults>
</compile_context>

<pallas_src>
import functools

import jax
import jax.numpy as jnp
from jax.experimental import pallas as pl
from jax.experimental.pallas import tpu as pltpu


def _dice_partial_kernel(logits_ref, tgt_ref, inter_ref, card_ref, *,
                         hw, tile_px, binary):
    """Per-(batch, pixel-block) partial intersection / cardinality sums."""
    j = pl.program_id(1)
    p = tile_px
    n_cls = inter_ref.shape[2]          # effective classes (2 if binary else C)

    # Validity mask for the ragged tail of the pixel axis.  Out-of-bounds
    # lanes of the last block hold garbage; use selects (not multiplies) so
    # no inf/NaN can leak into the accumulations.
    px = j * p + jax.lax.broadcasted_iota(jnp.int32, (1, p), 1)
    valid = px < hw                                              # [1, P] bool

    x = logits_ref[0].astype(jnp.float32)                        # [C_in, P]
    x = jnp.where(valid, x, 0.0)
    tgt = tgt_ref[0]                                             # [1, P] int32
    cls = jax.lax.broadcasted_iota(jnp.int32, (n_cls, p), 0)     # [n_cls, P]

    if binary:
        # probas = cat([sigmoid(x), 1 - sigmoid(x)]); one-hot = [t==1, t==0].
        pos = 1.0 / (1.0 + jnp.exp(-x))                          # [1, P]
        probas = jnp.where(cls == 0, pos, 1.0 - pos)             # [2, P]
        one_hot = ((1 - cls) == tgt).astype(jnp.float32)         # [2, P]
    else:
        # Channel softmax == F.softmax(inputs, dim=1): channels on sublanes,
        # pixels on lanes -> the channel reduction is cheap cross-sublane XLU.
        x_max = jnp.max(x, axis=0, keepdims=True)                # [1, P]
        e = jnp.exp(x - x_max)                                   # [C, P]
        denom = jnp.sum(e, axis=0, keepdims=True)                # [1, P]
        probas = e / denom                                       # [C, P]
        # One-hot of the integer targets == torch.eye(C)[targets.squeeze(1)].
        one_hot = (cls == tgt).astype(jnp.float32)               # [C, P]

    probas = jnp.where(valid, probas, 0.0)
    one_hot = jnp.where(valid, one_hot, 0.0)

    # Per-class partial sums over this pixel block (two lane-axis reduces per
    # grid step); cardinality done as one fused reduce of (probas + one_hot).
    inter = jnp.sum(probas * one_hot, axis=1, keepdims=True)     # [n_cls, 1]
    card = jnp.sum(probas + one_hot, axis=1, keepdims=True)      # [n_cls, 1]

    inter_ref[...] = inter[None, None]
    card_ref[...] = card[None, None]


def _choose_px_tile(hw, n_cls, target_block_bytes=2 << 20):
    """Largest 128-aligned pixel tile with ~target bytes of f32 working set.

    Sized on the f32 in-kernel working set (independent of the input dtype),
    so double-buffered input blocks plus temporaries stay well under the
    scoped-VMEM limit on v5e / v6e / v7x while keeping per-step DMAs large
    enough to sit near the HBM roofline.
    """
    t = target_block_bytes // (4 * max(n_cls, 1))
    if t >= hw:
        return hw                       # one full-extent block, no ragged tail
    return max(128, (t // 128) * 128)


def dice_loss(inputs, targets, weights, *, num_classes, eps=1e-7):
    """Sørensen–Dice loss matching DiceLoss.forward.

    inputs:  [B, C, H, W] float logits (C == num_classes, or C == 1 for the
             binary sigmoid branch).
    targets: [B, 1, H, W] integer class labels.
    weights: per-class weights ([C], or [2] for the binary branch).
    """
    B, C, H, W = inputs.shape
    hw = H * W
    binary = (num_classes == 1)
    if binary:
        assert C == 1, "binary branch expects a single logit channel"
        n_out = 2
    else:
        assert C == num_classes
        n_out = C

    # Free reshapes only (contiguous NCHW): no transpose, no pad, no upcast.
    logits = inputs.reshape(B, C, hw)
    tgt = targets.reshape(B, 1, hw)
    if tgt.dtype != jnp.int32:
        tgt = tgt.astype(jnp.int32)

    tile_px = _choose_px_tile(hw, n_out)
    n_blk = pl.cdiv(hw, tile_px)

    inter_p, card_p = pl.pallas_call(
        functools.partial(_dice_partial_kernel,
                          hw=hw, tile_px=tile_px, binary=binary),
        out_shape=(
            jax.ShapeDtypeStruct((B, n_blk, n_out, 1), jnp.float32),
            jax.ShapeDtypeStruct((B, n_blk, n_out, 1), jnp.float32),
        ),
        grid_spec=pltpu.PrefetchScalarGridSpec(
            num_scalar_prefetch=0,
            grid=(B, n_blk),
            in_specs=[
                pl.BlockSpec((1, C, tile_px), lambda b, j: (b, 0, j)),
                pl.BlockSpec((1, 1, tile_px), lambda b, j: (b, 0, j)),
            ],
            out_specs=(
                pl.BlockSpec((1, 1, n_out, 1), lambda b, j: (b, j, 0, 0)),
                pl.BlockSpec((1, 1, n_out, 1), lambda b, j: (b, j, 0, 0)),
            ),
        ),
        compiler_params=pltpu.CompilerParams(
            dimension_semantics=("parallel", "parallel"),
            vmem_limit_bytes=64 << 20),
    )(logits, tgt)

    # Tiny O(B * n_blk * n_out) combine in plain JAX.
    inter = jnp.sum(inter_p, axis=(0, 1))[:, 0]                  # [n_out]
    card = jnp.sum(card_p, axis=(0, 1))[:, 0]                    # [n_out]
    dice = 2.0 * inter / (card + eps)
    # TODO(synk): the reference calls `.mean(1)` on this 1-D tensor, which
    # errors in PyTorch for [B,1,H,W] targets; it is treated as identity here.
    w = weights.astype(jnp.float32)
    return 1.0 - jnp.dot(dice, w) / jnp.sum(w)


if __name__ == "__main__":
    key = jax.random.PRNGKey(0)
    B, C, H, W = 2, 4, 16, 16
    k1, k2, k3 = jax.random.split(key, 3)

    # Multi-class (softmax) branch.
    inputs = jax.random.normal(k1, (B, C, H, W), dtype=jnp.float32)
    targets = jax.random.randint(k2, (B, 1, H, W), 0, C, dtype=jnp.int32)
    weights = jnp.arange(1, C + 1, dtype=jnp.float32)
    loss = dice_loss(inputs, targets, weights, num_classes=C, eps=1e-7)
    jax.block_until_ready(loss)

    # Binary (sigmoid) branch: num_classes == 1 -> 2 effective classes.
    inputs_b = jax.random.normal(k3, (B, 1, H, W), dtype=jnp.float32)
    targets_b = (targets > (C // 2)).astype(jnp.int32)
    weights_b = jnp.array([1.0, 2.0], dtype=jnp.float32)
    loss_b = dice_loss(inputs_b, targets_b, weights_b, num_classes=1, eps=1e-7)
    jax.block_until_ready(loss_b)

    print("KERNEL_OK")
</pallas_src>

<mosaic_0001>
module attributes {stable_mosaic.version = 11 : i64} {
  func.func @_dice_partial_kernel(%arg0: i32, %arg1: i32, %arg2: memref<1x4x256xf32, #tpu.memory_space<vmem>>, %arg3: memref<1x1x256xi32, #tpu.memory_space<vmem>>, %arg4: memref<1x1x4x1xf32, #tpu.memory_space<vmem>>, %arg5: memref<1x1x4x1xf32, #tpu.memory_space<vmem>>) attributes {dimension_semantics = [#tpu.dimension_semantics<parallel>, #tpu.dimension_semantics<parallel>], iteration_bounds = array<i64: 2, 1>, scalar_prefetch = 0 : i64, scratch_operands = 0 : i64, tpu.core_type = #tpu.core_type<tc>, window_params = [{transform_indices = @transform_0, window_bounds = array<i64: 1, 4, 256>}, {transform_indices = @transform_1, window_bounds = array<i64: 1, 1, 256>}, {transform_indices = @transform_2, window_bounds = array<i64: 1, 1, 4, 1>}, {transform_indices = @transform_3, window_bounds = array<i64: 1, 1, 4, 1>}]} {
    %c256_i32 = arith.constant 256 : i32
    %0 = arith.muli %arg1, %c256_i32 : i32
    %1 = tpu.iota {dimensions = array<i32: 1>} : vector<1x256xi32>
    %2 = vector.broadcast %0 : i32 to vector<1x256xi32>
    %3 = arith.addi %2, %1 : vector<1x256xi32>
    %c256_i32_0 = arith.constant 256 : i32
    %4 = vector.broadcast %c256_i32_0 : i32 to vector<1x256xi32>
    %5 = arith.cmpi slt, %3, %4 : vector<1x256xi32>
    %c0 = arith.constant 0 : index
    %c0_1 = arith.constant 0 : index
    %c0_2 = arith.constant 0 : index
    %6 = vector.load %arg2[%c0, %c0_1, %c0_2] : memref<1x4x256xf32, #tpu.memory_space<vmem>>, vector<1x4x256xf32>
    %7 = vector.shape_cast %6 : vector<1x4x256xf32> to vector<4x256xf32>
    %cst = arith.constant 0.000000e+00 : f32
    %8 = vector.shape_cast %5 : vector<1x256xi1> to vector<1x256xi1>
    %9 = vector.broadcast %8 : vector<1x256xi1> to vector<4x256xi1>
    %10 = vector.broadcast %cst : f32 to vector<4x256xf32>
    %11 = arith.select %9, %7, %10 : vector<4x256xi1>, vector<4x256xf32>
    %c0_3 = arith.constant 0 : index
    %c0_4 = arith.constant 0 : index
    %c0_5 = arith.constant 0 : index
    %12 = vector.load %arg3[%c0_3, %c0_4, %c0_5] : memref<1x1x256xi32, #tpu.memory_space<vmem>>, vector<1x1x256xi32>
    %13 = vector.shape_cast %12 : vector<1x1x256xi32> to vector<1x256xi32>
    %14 = tpu.iota {dimensions = array<i32: 0>} : vector<4x256xi32>
    %cst_6 = arith.constant dense<0xFF800000> : vector<256xf32>
    %15 = vector.multi_reduction <maximumf>, %11, %cst_6 [0] : vector<4x256xf32> to vector<256xf32>
    %16 = vector.shape_cast %15 : vector<256xf32> to vector<1x256xf32>
    %17 = vector.broadcast %16 : vector<1x256xf32> to vector<4x256xf32>
    %18 = arith.subf %11, %17 : vector<4x256xf32>
    %19 = math.exp %18 : vector<4x256xf32>
    %cst_7 = arith.constant dense<0.000000e+00> : vector<256xf32>
    %20 = vector.multi_reduction <add>, %19, %cst_7 [0] : vector<4x256xf32> to vector<256xf32>
    %21 = vector.shape_cast %20 : vector<256xf32> to vector<1x256xf32>
    %22 = vector.broadcast %21 : vector<1x256xf32> to vector<4x256xf32>
    %23 = arith.divf %19, %22 : vector<4x256xf32>
    %24 = vector.broadcast %13 : vector<1x256xi32> to vector<4x256xi32>
    %25 = arith.cmpi eq, %14, %24 : vector<4x256xi32>
    %26 = arith.extui %25 : vector<4x256xi1> to vector<4x256xi32>
    %27 = arith.sitofp %26 : vector<4x256xi32> to vector<4x256xf32>
    %cst_8 = arith.constant 0.000000e+00 : f32
    %28 = vector.shape_cast %5 : vector<1x256xi1> to vector<1x256xi1>
    %29 = vector.broadcast %28 : vector<1x256xi1> to vector<4x256xi1>
    %30 = vector.broadcast %cst_8 : f32 to vector<4x256xf32>
    %31 = arith.select %29, %23, %30 : vector<4x256xi1>, vector<4x256xf32>
    %cst_9 = arith.constant 0.000000e+00 : f32
    %32 = vector.shape_cast %5 : vector<1x256xi1> to vector<1x256xi1>
    %33 = vector.broadcast %32 : vector<1x256xi1> to vector<4x256xi1>
    %34 = vector.broadcast %cst_9 : f32 to vector<4x256xf32>
    %35 = arith.select %33, %27, %34 : vector<4x256xi1>, vector<4x256xf32>
    %36 = arith.mulf %31, %35 : vector<4x256xf32>
    %cst_10 = arith.constant dense<0.000000e+00> : vector<4xf32>
    %37 = vector.multi_reduction <add>, %36, %cst_10 [1] : vector<4x256xf32> to vector<4xf32>
    %38 = vector.shape_cast %37 : vector<4xf32> to vector<4x1xf32>
    %39 = arith.addf %31, %35 : vector<4x256xf32>
    %cst_11 = arith.constant dense<0.000000e+00> : vector<4xf32>
    %40 = vector.multi_reduction <add>, %39, %cst_11 [1] : vector<4x256xf32> to vector<4xf32>
    %41 = vector.shape_cast %40 : vector<4xf32> to vector<4x1xf32>
    %42 = vector.shape_cast %38 : vector<4x1xf32> to vector<1x1x4x1xf32>
    %c0_12 = arith.constant 0 : index
    %c0_13 = arith.constant 0 : index
    %c0_14 = arith.constant 0 : index
    %c0_15 = arith.constant 0 : index
    %43 = vector.load %arg4[%c0_12, %c0_13, %c0_14, %c0_15] : memref<1x1x4x1xf32, #tpu.memory_space<vmem>>, vector<1x1x4x1xf32>
    tpu.vector_store %arg4[%c0_12, %c0_13, %c0_14, %c0_15], %42 {strides = array<i32>} : memref<1x1x4x1xf32, #tpu.memory_space<vmem>>, vector<1x1x4x1xf32>,
    %44 = vector.shape_cast %41 : vector<4x1xf32> to vector<1x1x4x1xf32>
    %c0_16 = arith.constant 0 : index
    %c0_17 = arith.constant 0 : index
    %c0_18 = arith.constant 0 : index
    %c0_19 = arith.constant 0 : index
    %45 = vector.load %arg5[%c0_16, %c0_17, %c0_18, %c0_19] : memref<1x1x4x1xf32, #tpu.memory_space<vmem>>, vector<1x1x4x1xf32>
    tpu.vector_store %arg5[%c0_16, %c0_17, %c0_18, %c0_19], %44 {strides = array<i32>} : memref<1x1x4x1xf32, #tpu.memory_space<vmem>>, vector<1x1x4x1xf32>,
    return
  }
  func.func @transform_0(%arg0: i32, %arg1: i32) -> (i32, i32, i32) {
    %c0_i32 = arith.constant 0 : i32
    %c0_i32_0 = arith.constant 0 : i32
    return %arg0, %c0_i32, %arg1 : i32, i32, i32
  }
  func.func @transform_1(%arg0: i32, %arg1: i32) -> (i32, i32, i32) {
    %c0_i32 = arith.constant 0 : i32
    %c0_i32_0 = arith.constant 0 : i32
    return %arg0, %c0_i32, %arg1 : i32, i32, i32
  }
  func.func @transform_2(%arg0: i32, %arg1: i32) -> (i32, i32, i32, i32) {
    %c0_i32 = arith.constant 0 : i32
    %c0_i32_0 = arith.constant 0 : i32
    %c0_i32_1 = arith.constant 0 : i32
    return %arg0, %arg1, %c0_i32, %c0_i32_0 : i32, i32, i32, i32
  }
  func.func @transform_3(%arg0: i32, %arg1: i32) -> (i32, i32, i32, i32) {
    %c0_i32 = arith.constant 0 : i32
    %c0_i32_0 = arith.constant 0 : i32
    %c0_i32_1 = arith.constant 0 : i32
    return %arg0, %arg1, %c0_i32, %c0_i32_0 : i32, i32, i32, i32
  }
}

</mosaic_0001>

<llo_original>
// kernel: tpu_custom_call.1
$region0: #{tpu_custom_call.1}
  #allocation0 [shape = 'u32[]', space=smem, size = 0x4, offset = 0x4, fixed_abs, tag = 'smem constant byte address 0x4 - core index']
  #allocation1 [shape = 'u32[144,128]{1,0:T(1,128)}', space=vmem, size = 0x12000, scoped, tag = 'internal scratch']
  %s0 = inlined_call_operand.hbm [shape: f32[2,4,256], index: 0, kind: input, shape index: {}]
  %s1 = inlined_call_operand.hbm [shape: s32[2,1,256], index: 1, kind: input, shape index: {}]
  %s2 = inlined_call_operand.hbm [shape: f32[2,1,4,1], index: 2, kind: output, shape index: {0}]
  %s3 = inlined_call_operand.hbm [shape: f32[2,1,4,1], index: 3, kind: output, shape index: {1}]
  %4 = xla_tuple %s2, %s3
  %s5 = sld [smem:[#allocation0]]
  $region57: #{tpu_custom_call.1} parent=0
    _
  %s7 = ssub.s32 1, %s5
  %s8 = scalar_select 0, %s7, %s5
  $region1: #{tpu_custom_call.1} parent=0
    #allocation2 [shape = 'u8[8192]{0}', space=vmem, size = 0x2000, scoped, tag = 'input window, operand 0']
    #allocation3 [shape = 's32[2]{0}', space=sflag, size = 0x8, scoped, tag = 'scoped memory for tpu_custom_call.1']
    #allocation4 [shape = 's32[2]{0}', space=sflag, size = 0x8, scoped, tag = 'scoped memory for tpu_custom_call.1']
    #allocation5 [shape = 'u8[2048]{0}', space=vmem, size = 0x800, scoped, tag = 'input window, operand 1']
    #allocation6 [shape = 's32[2]{0}', space=sflag, size = 0x8, scoped, tag = 'scoped memory for tpu_custom_call.1']
    #allocation7 [shape = 'u8[4096]{0}', space=vmem, size = 0x1000, scoped, tag = 'output window, operand 0']
    #allocation8 [shape = 'u8[4096]{0}', space=vmem, size = 0x1000, scoped, tag = 'output window, operand 1']
    #allocation9 [shape = 's32[2]{0}', space=sflag, size = 0x8, scoped, tag = 'scoped memory for tpu_custom_call.1']
    %9 = vsyncpa [#allocation3], 0
    %s10 = scalar_lea.sflag [#allocation3], 1
    %11 = vsyncpa %s10, 0
    %12 = vsyncpa [#allocation6], 0
    %s13 = scalar_lea.sflag [#allocation6], 1
    %14 = vsyncpa %s13, 0
    %15 = vsyncpa [#allocation4], 0
    %s16 = scalar_lea.sflag [#allocation4], 1
    %17 = vsyncpa %s16, 0
    %18 = vsyncpa [#allocation9], 0
    %s19 = scalar_lea.sflag [#allocation9], 1
    %20 = vsyncpa %s19, 0
    loop: start=0, step=1, limit=4
    $region2: #{tpu_custom_call.1} parent=1 // loop_pre_header
      _
    $region3: #{tpu_custom_call.1} parent=1 // loop_header
      %s22 = sphi 0, %s26
      %p23 = scmp.ge.s32.totalorder %s22, 4
      %s29 = sphi 0, %s41
      %s30 = sphi 0, %s37
      %s31 = sphi 0, %s29
      %s32 = sphi 0, %s30
      %s33 = sphi 0, %s31
      %s34 = sphi 0, %s32
      %s46 = sphi 0, %s48
      %s49 = sphi 0, %s46
      %s50 = sphi 0, %s49
      %s66 = sphi 0, %s50
      %s74 = sphi 0, %s76
      %s77 = sphi 0, %s74
      %s78 = sphi 0, %s77
      %s94 = sphi 0, %s78
      %s102 = sphi 0, %s104
      %s105 = sphi 0, %s102
      %s106 = sphi 0, %s105
      %s122 = sphi 0, %s106
      %s130 = sphi 0, %s132
      %s133 = sphi 0, %s130
      %s134 = sphi 0, %s133
      %s150 = sphi 0, %s134
    $region4: #{tpu_custom_call.1} parent=1 // loop_header_branch
      %25 = sbr.rel (%p23) target = $region8
    $region5: #{tpu_custom_call.1} parent=1 // loop_body
      %s27 = ssub.s32 %s22, 1
      %s28 = ssub.s32 %s22, 2
      %s35 = sadd.s32 1, %s30
      %p36 = scmp.ge.s32.totalorder %s35, 1
      %s37 = scalar_select %p36, 0, %s35
      %s38 = sadd.s32 1, %s29
      %s39 = scalar_select %p36, %s38, %s29
      %p40 = scmp.ge.s32.totalorder %s39, 2
      %s41 = scalar_select %p40, 0, %s39
      %s42 = ssub.s32 %s29, %s41
      %s43 = ssub.s32 %s30, %s37
      %s44 = sor.u32 %s42, %s43
      %p45 = scmp.eq.s32.totalorder %s44, 0
      %s47 = sadd.s32 %s46, 1
      %s48 = scalar_select %p45, %s46, %s47
      %p51 = pneg %p45
      %p52 = scmp.eq.s32.totalorder %s22, 1
      %p53 = por %p51, %p52
      %p54 = scmp.ne.s32.totalorder %s46, %s49
      %p55 = scmp.eq.s32.totalorder %s22, 0
      %p56 = por %p54, %p55
      %p57 = scmp.ne.s32.totalorder %s46, %s49
      %p58 = scmp.eq.s32.totalorder %s27, 1
      %p59 = por %p57, %p58
      %p60 = scmp.ne.s32.totalorder %s49, %s50
      %p61 = scmp.eq.s32.totalorder %s27, 0
      %p62 = por %p60, %p61
      %p63 = scmp.ne.s32.totalorder %s49, %s50
      %p64 = scmp.eq.s32.totalorder %s28, 1
      %p65 = por %p63, %p64
      %p67 = scmp.ne.s32.totalorder %s50, %s66
      %p68 = scmp.eq.s32.totalorder %s28, 0
      %p69 = por %p67, %p68
      %s70 = ssub.s32 %s29, %s41
      %s71 = ssub.s32 %s30, %s37
      %s72 = sor.u32 %s70, %s71
      %p73 = scmp.eq.s32.totalorder %s72, 0
      %s75 = sadd.s32 %s74, 1
      %s76 = scalar_select %p73, %s74, %s75
      %p79 = pneg %p73
      %p80 = scmp.eq.s32.totalorder %s22, 1
      %p81 = por %p79, %p80
      %p82 = scmp.ne.s32.totalorder %s74, %s77
      %p83 = scmp.eq.s32.totalorder %s22, 0
      %p84 = por %p82, %p83
      %p85 = scmp.ne.s32.totalorder %s74, %s77
      %p86 = scmp.eq.s32.totalorder %s27, 1
      %p87 = por %p85, %p86
      %p88 = scmp.ne.s32.totalorder %s77, %s78
      %p89 = scmp.eq.s32.totalorder %s27, 0
      %p90 = por %p88, %p89
      %p91 = scmp.ne.s32.totalorder %s77, %s78
      %p92 = scmp.eq.s32.totalorder %s28, 1
      %p93 = por %p91, %p92
      %p95 = scmp.ne.s32.totalorder %s78, %s94
      %p96 = scmp.eq.s32.totalorder %s28, 0
      %p97 = por %p95, %p96
      %s98 = ssub.s32 %s29, %s41
      %s99 = ssub.s32 %s30, %s37
      %s100 = sor.u32 %s98, %s99
      %p101 = scmp.eq.s32.totalorder %s100, 0
      %s103 = sadd.s32 %s102, 1
      %s104 = scalar_select %p101, %s102, %s103
      %p107 = pneg %p101
      %p108 = scmp.eq.s32.totalorder %s22, 1
      %p109 = por %p107, %p108
      %p110 = scmp.ne.s32.totalorder %s102, %s105
      %p111 = scmp.eq.s32.totalorder %s22, 0
      %p112 = por %p110, %p111
      %p113 = scmp.ne.s32.totalorder %s102, %s105
      %p114 = scmp.eq.s32.totalorder %s27, 1
      %p115 = por %p113, %p114
      %p116 = scmp.ne.s32.totalorder %s105, %s106
      %p117 = scmp.eq.s32.totalorder %s27, 0
      %p118 = por %p116, %p117
      %p119 = scmp.ne.s32.totalorder %s105, %s106
      %p120 = scmp.eq.s32.totalorder %s28, 1
      %p121 = por %p119, %p120
      %p123 = scmp.ne.s32.totalorder %s106, %s122
      %p124 = scmp.eq.s32.totalorder %s28, 0
      %p125 = por %p123, %p124
      %s126 = ssub.s32 %s29, %s41
      %s127 = ssub.s32 %s30, %s37
      %s128 = sor.u32 %s126, %s127
      %p129 = scmp.eq.s32.totalorder %s128, 0
      %s131 = sadd.s32 %s130, 1
      %s132 = scalar_select %p129, %s130, %s131
      %p135 = pneg %p129
      %p136 = scmp.eq.s32.totalorder %s22, 1
      %p137 = por %p135, %p136
      %p138 = scmp.ne.s32.totalorder %s130, %s133
      %p139 = scmp.eq.s32.totalorder %s22, 0
      %p140 = por %p138, %p139
      %p141 = scmp.ne.s32.totalorder %s130, %s133
      %p142 = scmp.eq.s32.totalorder %s27, 1
      %p143 = por %p141, %p142
      %p144 = scmp.ne.s32.totalorder %s133, %s134
      %p145 = scmp.eq.s32.totalorder %s27, 0
      %p146 = por %p144, %p145
      %p147 = scmp.ne.s32.totalorder %s133, %s134
      %p148 = scmp.eq.s32.totalorder %s28, 1
      %p149 = por %p147, %p148
      %p151 = scmp.ne.s32.totalorder %s134, %s150
      %p152 = scmp.eq.s32.totalorder %s28, 0
      %p153 = por %p151, %p152
      %p154 = scmp.le.s32.totalorder 1, %s22
      %p155 = scmp.lt.s32.totalorder %s22, 3
      %p156 = pnand %p154, %p155
      %p157 = pneg %p156
      // Predicated region
      $region9: #{tpu_custom_call.1} parent=5 // pred_check
        _
      $region10: #{tpu_custom_call.1} parent=5 // pred_check_branch
        %159 = sbr.rel (%p156) target = $region12
      $region11: #{tpu_custom_call.1} parent=5 // pred_region
        %s160 = ssub.s32 %s22, 1
      $region12: #{tpu_custom_call.1} parent=5 // pred_fallthru
        _
      %p161 = scmp.lt.s32.totalorder %s22, 2
      // Predicated region
      $region13: #{tpu_custom_call.1} parent=5 // pred_check
        %p162 = pneg %p161
      $region14: #{tpu_custom_call.1} parent=5 // pred_check_branch
        %164 = sbr.rel (%p162) target = $region16
      $region15: #{tpu_custom_call.1} parent=5 // pred_region
        // Predicated region
        $region17: #{tpu_custom_call.1} parent=15 // pred_check
          %p165 = pneg %p56
        $region18: #{tpu_custom_call.1} parent=15 // pred_check_branch
          %167 = sbr.rel (%p165) target = $region20
        $region19: #{tpu_custom_call.1} parent=15 // pred_region
          %s168 = sand.u32 %s46, 1
          %s169 = scalar_lea.sflag [#allocation3], %s168
          %s170 = sand.u32 %s46, 1
          %s171 = smul.addr %s170, 8
          %s172 = scalar_lea.vmem [#allocation2], %s171
          %s173 = smul.u32 2, %s30
          %s175 = ssub.s32 128, 128
          %176 = vsyncadd %s169, %s175
          %s177 = smul.addr %s29, 2
          %s178 = sadd.s32 %s173, %s177
          %s179 = smul.addr %s178, 64
          %s180 = scalar_lea.hbm %s0, %s179
          %s182 = sshll.u32 %s172, 4
          %s183 = int_to_ptr.vmem [resolvable:$true] %s182
          %185 = dma.hbm_to_vmem [thread:$0]  %s180, 128, %s183, %s169
        $region20: #{tpu_custom_call.1} parent=15 // pred_fallthru
          _
        // Predicated region
        $region21: #{tpu_custom_call.1} parent=15 // pred_check
          %p186 = pneg %p84
        $region22: #{tpu_custom_call.1} parent=15 // pred_check_branch
          %188 = sbr.rel (%p186) target = $region24
        $region23: #{tpu_custom_call.1} parent=15 // pred_region
          %s189 = sand.u32 %s74, 1
          %s190 = scalar_lea.sflag [#allocation6], %s189
          %s191 = sand.u32 %s74, 1
          %s192 = smul.addr %s191, 2
          %s193 = scalar_lea.vmem [#allocation5], %s192
          %s194 = smul.u32 2, %s30
          %s196 = ssub.s32 32, 32
          %197 = vsyncadd %s190, %s196
          %s198 = smul.addr %s29, 2
          %s199 = sadd.s32 %s194, %s198
          %s200 = smul.addr %s199, 16
          %s201 = scalar_lea.hbm %s1, %s200
          %s203 = sshll.u32 %s193, 4
          %s204 = int_to_ptr.vmem [resolvable:$true] %s203
          %206 = dma.hbm_to_vmem [thread:$0]  %s201, 32, %s204, %s190
        $region24: #{tpu_custom_call.1} parent=15 // pred_fallthru
          _
      $region16: #{tpu_custom_call.1} parent=5 // pred_fallthru
        _
      %p207 = scmp.le.s32.totalorder 1, %s22
      %p208 = scmp.lt.s32.totalorder %s22, 3
      %p209 = pnand %p207, %p208
      %p210 = pneg %p209
      // Predicated region
      $region25: #{tpu_custom_call.1} parent=5 // pred_check
        _
      $region26: #{tpu_custom_call.1} parent=5 // pred_check_branch
        %212 = sbr.rel (%p209) target = $region28
      $region27: #{tpu_custom_call.1} parent=5 // pred_region
        %s213 = ssub.s32 %s22, 1
        %s214 = sand.u32 %s49, 1
        %s215 = scalar_lea.sflag [#allocation3], %s214
        %s216 = sand.u32 %s49, 1
        %s217 = smul.addr %s216, 8
        %s218 = scalar_lea.vmem [#allocation2], %s217
        // Predicated region
        $region29: #{tpu_custom_call.1} parent=27 // pred_check
          %p219 = pneg %p62
        $region30: #{tpu_custom_call.1} parent=27 // pred_check_branch
          %221 = sbr.rel (%p219) target = $region32
        $region31: #{tpu_custom_call.1} parent=27 // pred_region
          %222 = dma.done %s215, 128
        $region32: #{tpu_custom_call.1} parent=27 // pred_fallthru
          _
        %s223 = sand.u32 %s77, 1
        %s224 = scalar_lea.sflag [#allocation6], %s223
        %s225 = sand.u32 %s77, 1
        %s226 = smul.addr %s225, 2
        %s227 = scalar_lea.vmem [#allocation5], %s226
        // Predicated region
        $region33: #{tpu_custom_call.1} parent=27 // pred_check
          %p228 = pneg %p90
        $region34: #{tpu_custom_call.1} parent=27 // pred_check_branch
          %230 = sbr.rel (%p228) target = $region36
        $region35: #{tpu_custom_call.1} parent=27 // pred_region
          %231 = dma.done %s224, 32
        $region36: #{tpu_custom_call.1} parent=27 // pred_fallthru
          _
        %s232 = sand.u32 %s49, 1
        %s233 = scalar_lea.sflag [#allocation3], %s232
        %s234 = sand.u32 %s49, 1
        %s235 = smul.addr %s234, 8
        %s236 = scalar_lea.vmem [#allocation2], %s235
        %p237 = pneg %p62
        %p238 = pneg %p59
        %s239 = sand.u32 %s77, 1
        %s240 = scalar_lea.sflag [#allocation6], %s239
        %s241 = sand.u32 %s77, 1
        %s242 = smul.addr %s241, 2
        %s243 = scalar_lea.vmem [#allocation5], %s242
        %p244 = pneg %p90
        %p245 = pneg %p87
        %p246 = pneg %p118
        %p247 = pneg %p115
        %s248 = sand.u32 %s105, 1
        %s249 = scalar_lea.sflag [#allocation4], %s248
        %s250 = sand.u32 %s105, 1
        %s251 = smul.addr %s250, 4
        %s252 = scalar_lea.vmem [#allocation7], %s251
        %p253 = pneg %p146
        %p254 = pneg %p143
        %s255 = sand.u32 %s133, 1
        %s256 = scalar_lea.sflag [#allocation9], %s255
        %s257 = sand.u32 %s133, 1
        %s258 = smul.addr %s257, 4
        %s259 = scalar_lea.vmem [#allocation8], %s258
        %s260 = smul.u32 2, %s32
        %s261 = smul.u32 2, %s32
        %s262 = smul.u32 %s32, 256
        %v263 = vlaneseq
        %v264 = vand.u32 %v263, 127
        %v265 = vadd.s32 %v264, 128
        %v266 = vstv %s262
        %v267 = vadd.s32 %v266, %v264
        %v268 = vadd.s32 %v266, %v265
        %vm269 = vcmp.lt.s32.totalorder %v267, 256
        %vm270 = vcmp.lt.s32.totalorder %v268, 256
        %v271 = vld [vmem:[%s218] sm:$0xff]
        %v272 = vsel %vm269, 1, 0
        %v273 = vsel %vm270, 1, 0
        %vm274 = vcmp.eq.s32.totalorder %v272, 1
        %vm275 = vcmp.eq.s32.totalorder %v273, 1
        %v277 = vcombine.high %v271, %v271
        %v279 = vsel %vm274, %v271, 0.0
        %v280 = vsel %vm275, %v277, 0.0
        %v281 = vld [vmem:[%s227] sm:$0x3]
        %v282 = vlaneseq
        %v283 = vshrl.u32 %v282, 7
        %vm284 = vcmask 1043456
        %v285 = vsel %vm284, %v279, -inf
        %v286 = vrot.slane %v285, 4
        %v287 = vmax.f32 %v285, %v286
        %v288 = vrot.slane %v287, 2
        %v289 = vmax.f32 %v287, %v288
        %v290 = vrot.slane %v289, 1
        %v291 = vmax.f32 %v289, %v290
        %v292 = vsel %vm284, %v280, -inf
        %v293 = vrot.slane %v292, 4
        %v294 = vmax.f32 %v292, %v293
        %v295 = vrot.slane %v294, 2
        %v296 = vmax.f32 %v294, %v295
        %v297 = vrot.slane %v296, 1
        %v298 = vmax.f32 %v296, %v297
        %v299 = vsub.f32 %v279, %v291
        %v300 = vsub.f32 %v280, %v298
        %v301 = vmul.f32 %v299, 1.442695
        %v302 = vpow.pop %v301
        %v303 = vmul.f32 %v300, 1.442695
        %v304 = vpow.pop %v303
        %v305 = vsel %vm284, %v302, 0.0
        %v306 = vrot.slane %v305, 4
        %v307 = vadd.f32 %v305, %v306
        %v308 = vrot.slane %v307, 2
        %v309 = vadd.f32 %v307, %v308
        %v310 = vrot.slane %v309, 1
        %v311 = vadd.f32 %v309, %v310
        %v312 = vsel %vm284, %v304, 0.0
        %v313 = vrot.slane %v312, 4
        %v314 = vadd.f32 %v312, %v313
        %v315 = vrot.slane %v314, 2
        %v316 = vadd.f32 %v314, %v315
        %v317 = vrot.slane %v316, 1
        %v318 = vadd.f32 %v316, %v317
        %v319 = vrcp.pop %v311
        %v320 = vmul.f32 %v302, %v319
        %v321 = vrcp.pop %v318
        %v322 = vmul.f32 %v304, %v321
        %v323 = vlaneseq
        %v324 = vshrl.u32 %v323, 7
        %v325 = vsub.s32 0, %v324
        %v326 = vrot.slane %v281, %v325
        %v327 = vlaneseq
        %v328 = vshrl.u32 %v327, 7
        %v329 = vsub.s32 1, %v328
        %v330 = vrot.slane %v281, %v329
        %vm331 = vcmp.eq.s32.totalorder %v283, %v326
        %vm332 = vcmp.eq.s32.totalorder %v283, %v330
        %v333 = vsel %vm331, 1, 0
        %v334 = vsel %vm332, 1, 0
        %v335 = vcvt.s32.f32 %v333
        %v336 = vcvt.s32.f32 %v334
        %v337 = vsel %vm274, %v320, 0.0
        %v338 = vsel %vm275, %v322, 0.0
        %v339 = vsel %vm274, %v335, 0.0
        %v340 = vsel %vm275, %v336, 0.0
        %v341 = vmul.f32 %v337, %v339
        %v342 = vmul.f32 %v338, %v340
        %v343 = vsel %vm284, %v341, 0.0
        %v344 = vsel %vm284, %v342, 0.0
        %v345 = vadd.f32 %v343, %v344
        %346 = vadd.xlane.f32.xlu0 %v345
        %v347 = vpop.xlane.xlu0 %346
        %v348 = vadd.f32 %v337, %v339
        %v349 = vadd.f32 %v338, %v340
        %v350 = vsel %vm284, %v348, 0.0
        %v351 = vsel %vm284, %v349, 0.0
        %v352 = vadd.f32 %v350, %v351
        %353 = vadd.xlane.f32.xlu0 %v352
        %v354 = vpop.xlane.xlu0 %353
        %vm355 = vcmask 3072
        %356 = vst.msk [vmem:[%s252] sm:$0xf] %vm355, %v347
        %357 = vst.msk [vmem:[%s259] sm:$0xf] %vm355, %v354
        %s358 = sand.u32 %s105, 1
        %s359 = scalar_lea.sflag [#allocation4], %s358
        %s360 = sand.u32 %s105, 1
        %s361 = smul.addr %s360, 4
        %s362 = scalar_lea.vmem [#allocation7], %s361
        %s363 = sand.u32 %s133, 1
        %s364 = scalar_lea.sflag [#allocation9], %s363
        %s365 = sand.u32 %s133, 1
        %s366 = smul.addr %s365, 4
        %s367 = scalar_lea.vmem [#allocation8], %s366
        // Predicated region
        $region37: #{tpu_custom_call.1} parent=27 // pred_check
          %p368 = pneg %p115
        $region38: #{tpu_custom_call.1} parent=27 // pred_check_branch
          %370 = sbr.rel (%p368) target = $region40
        $region39: #{tpu_custom_call.1} parent=27 // pred_region
          %s372 = ssub.s32 64, 64
          %373 = vsyncadd %s359, %s372
          %s374 = sadd.s32 %s32, %s31
          %s375 = smul.addr %s374, 64
          %s376 = scalar_lea.hbm %s2, %s375
          %s378 = sshll.u32 %s362, 4
          %s379 = int_to_ptr.vmem [resolvable:$true] %s378
          %381 = dma.vmem_to_hbm [thread:$0]  %s379, 64, %s376, %s359
        $region40: #{tpu_custom_call.1} parent=27 // pred_fallthru
          _
        // Predicated region
        $region41: #{tpu_custom_call.1} parent=27 // pred_check
          %p382 = pneg %p143
        $region42: #{tpu_custom_call.1} parent=27 // pred_check_branch
          %384 = sbr.rel (%p382) target = $region44
        $region43: #{tpu_custom_call.1} parent=27 // pred_region
          %s386 = ssub.s32 64, 64
          %387 = vsyncadd %s364, %s386
          %s388 = sadd.s32 %s32, %s31
          %s389 = smul.addr %s388, 64
          %s390 = scalar_lea.hbm %s3, %s389
          %s392 = sshll.u32 %s367, 4
          %s393 = int_to_ptr.vmem [resolvable:$true] %s392
          %395 = dma.vmem_to_hbm [thread:$0]  %s393, 64, %s390, %s364
        $region44: #{tpu_custom_call.1} parent=27 // pred_fallthru
          _
      $region28: #{tpu_custom_call.1} parent=5 // pred_fallthru
        _
      %p396 = scmp.le.s32.totalorder 2, %s22
      // Predicated region
      $region45: #{tpu_custom_call.1} parent=5 // pred_check
        %p397 = pneg %p396
      $region46: #{tpu_custom_call.1} parent=5 // pred_check_branch
        %399 = sbr.rel (%p397) target = $region48
      $region47: #{tpu_custom_call.1} parent=5 // pred_region
        %s400 = ssub.s32 %s22, 2
        // Predicated region
        $region49: #{tpu_custom_call.1} parent=47 // pred_check
          %p401 = pneg %p121
        $region50: #{tpu_custom_call.1} parent=47 // pred_check_branch
          %403 = sbr.rel (%p401) target = $region52
        $region51: #{tpu_custom_call.1} parent=47 // pred_region
          %s404 = sand.u32 %s106, 1
          %s405 = scalar_lea.sflag [#allocation4], %s404
          %s406 = sand.u32 %s106, 1
          %s407 = smul.addr %s406, 4
          %s408 = scalar_lea.vmem [#allocation7], %s407
          %409 = dma.done %s405, 64
        $region52: #{tpu_custom_call.1} parent=47 // pred_fallthru
          _
        // Predicated region
        $region53: #{tpu_custom_call.1} parent=47 // pred_check
          %p410 = pneg %p149
        $region54: #{tpu_custom_call.1} parent=47 // pred_check_branch
          %412 = sbr.rel (%p410) target = $region56
        $region55: #{tpu_custom_call.1} parent=47 // pred_region
          %s413 = sand.u32 %s134, 1
          %s414 = scalar_lea.sflag [#allocation9], %s413
          %s415 = sand.u32 %s134, 1
          %s416 = smul.addr %s415, 4
          %s417 = scalar_lea.vmem [#allocation8], %s416
          %418 = dma.done %s414, 64
        $region56: #{tpu_custom_call.1} parent=47 // pred_fallthru
          _
      $region48: #{tpu_custom_call.1} parent=5 // pred_fallthru
        _
    $region6: #{tpu_custom_call.1} parent=1 // loop_footer
      %s26 = sadd.s32 1, %s22
    $region7: #{tpu_custom_call.1} parent=1 // loop_footer_branch
      %21 = sbr.rel target = $region3
    $region8: #{tpu_custom_call.1} parent=1 // loop_exit
      _
    %419 = vsyncpa [#allocation3], 1
    %s420 = scalar_lea.sflag [#allocation3], 1
    %421 = vsyncpa %s420, 1
    %422 = vsyncpa [#allocation6], 1
    %s423 = scalar_lea.sflag [#allocation6], 1
    %424 = vsyncpa %s423, 1
    %425 = vsyncpa [#allocation4], 1
    %s426 = scalar_lea.sflag [#allocation4], 1
    %427 = vsyncpa %s426, 1
    %428 = vsyncpa [#allocation9], 1
    %s429 = scalar_lea.sflag [#allocation9], 1
    %430 = vsyncpa %s429, 1

</llo_original>
